<compile_context>
chip_gen: v7x
topology: tpu7x:2x2x1
jax: 0.10.0
libtpu: 0.0.40
codegen_flags: <defaults>
</compile_context>

<pallas_src>
import functools

import numpy as np
import jax
import jax.numpy as jnp
from jax import lax
from jax.experimental import pallas as pl
from jax.experimental.pallas import tpu as pltpu

COATTN_SCALE = float(np.exp(np.log(100.0)))   # coattn_logit_scale.exp()
NORM_EPS = 1e-12                              # F.normalize eps


def vlfan_kernel(n_valid_ref, q_ref, x_ref, o_ref,
                 m_sc, l_sc, acc_sc, qn_sc, *, tile_n):
    """One grid step processes a (tile_n, C) slab of X with online softmax."""
    k = pl.program_id(0)
    nk = pl.num_programs(0)

    @pl.when(k == 0)
    def _init():
        m_sc[...] = jnp.full_like(m_sc, -jnp.inf)
        l_sc[...] = jnp.zeros_like(l_sc)
        acc_sc[...] = jnp.zeros_like(acc_sc)
        # Hoisted: l2-normalize Q once and fold in the 100x co-attention scale.
        Q = q_ref[...].astype(jnp.float32)
        q_sq = jnp.sum(Q * Q, axis=-1, keepdims=True)
        qn_sc[...] = (Q * lax.rsqrt(jnp.maximum(q_sq, NORM_EPS * NORM_EPS))) * COATTN_SCALE

    X = x_ref[...].astype(jnp.float32)                     # (tile_n, C) streamed tile
    x_sq = jnp.sum(X * X, axis=-1, keepdims=True)
    Xn = X * lax.rsqrt(jnp.maximum(x_sq, NORM_EPS * NORM_EPS))

    # s = (100 * Qn) @ Xn^T -> (nq, tile_n); contract feature axis on the MXU.
    s = lax.dot_general(qn_sc[...], Xn, (((1,), (1,)), ((), ())),
                        preferred_element_type=jnp.float32)

    # Mask instance columns past the true bag size N (ragged / padded tiles).
    col = lax.broadcasted_iota(jnp.int32, s.shape, 1) + k * tile_n
    s = jnp.where(col < n_valid_ref[0], s, -jnp.inf)

    # Online softmax update (numerically stable running max / sum).
    m_prev = m_sc[...]
    m_new = jnp.maximum(m_prev, jnp.max(s, axis=-1, keepdims=True))
    # Guard: a fully-masked padded tile keeps m_new == -inf; avoid exp(-inf - -inf)=NaN.
    safe_m = jnp.where(m_new == -jnp.inf, 0.0, m_new)
    alpha = jnp.exp(m_prev - safe_m)                       # rescale of previous partials
    p = jnp.exp(s - safe_m)                                # masked cols -> exp(-inf)=0
    l_sc[...] = alpha * l_sc[...] + jnp.sum(p, axis=-1, keepdims=True)
    acc_sc[...] = alpha * acc_sc[...] + jnp.dot(
        p, X, preferred_element_type=jnp.float32)          # unnormalized A @ X
    m_sc[...] = m_new

    @pl.when(k == nk - 1)
    def _finalize():
        # Exact per-query normalization (runs once over nq values), then mean pooling.
        out = acc_sc[...] / l_sc[...]                      # (nq, C)
        o_ref[...] = jnp.mean(out, axis=0, keepdims=True).astype(o_ref.dtype)


def vlfan_forward(X, Q, W, b, *, tile_n=None):
    """X: [1, N, C]; Q: [nq, C]; W: [C, C] (PyTorch out,in); b: [C]. Returns [1, C]."""
    assert X.shape[0] == 1, "VLFAN expects batch size 1 (bag of instances)."
    _, N, C = X.shape
    nq = Q.shape[0]

    # Auto tile selection: per-buffer X tile capped at ~8 MiB (<=16 MiB double-buffered,
    # comfortable on v7x's 64 MiB VMEM) and 8192 rows; big tiles amortize the ~0.35 us
    # fixed per-grid-step overhead which otherwise dominates for this memory-bound kernel.
    if tile_n is None:
        max_rows_by_vmem = max(8, (8 * 1024 * 1024) // (C * 4))
        tile_n = int(min(8192, max_rows_by_vmem))
    tile_n = max(8, (tile_n // 8) * 8)                      # sublane-aligned
    padded_min = ((N + 7) // 8) * 8
    if tile_n > padded_min:
        tile_n = padded_min                                 # single tile covers the bag
    n_tiles = (N + tile_n - 1) // tile_n
    n_pad = n_tiles * tile_n

    x2 = X[0]                                               # (N, C)
    if n_pad != N:
        x2 = jnp.pad(x2, ((0, n_pad - N), (0, 0)))          # zero rows, masked in-kernel

    kernel = functools.partial(vlfan_kernel, tile_n=tile_n)
    n_valid = jnp.asarray([N], dtype=jnp.int32)             # scalar-prefetched bag size

    pooled = pl.pallas_call(
        kernel,
        out_shape=jax.ShapeDtypeStruct((1, C), jnp.float32),
        grid_spec=pltpu.PrefetchScalarGridSpec(
            num_scalar_prefetch=1,                          # n_valid -> SMEM
            grid=(n_tiles,),
            in_specs=[
                pl.BlockSpec((nq, C), lambda k, n_ref: (0, 0)),       # Q: resident
                pl.BlockSpec((tile_n, C), lambda k, n_ref: (k, 0)),   # X: streamed over N
            ],
            out_specs=pl.BlockSpec((1, C), lambda k, n_ref: (0, 0)),
            scratch_shapes=[
                pltpu.VMEM((nq, 1), jnp.float32),   # running max m
                pltpu.VMEM((nq, 1), jnp.float32),   # running sum l
                pltpu.VMEM((nq, C), jnp.float32),   # running acc (A@X, unnormalized)
                pltpu.VMEM((nq, C), jnp.float32),   # hoisted 100 * l2norm(Q)
            ],
        ),
        compiler_params=pltpu.CompilerParams(
            dimension_semantics=("arbitrary",),     # reduction axis carries scratch state
            vmem_limit_bytes=48 * 1024 * 1024,
        ),
    )(n_valid, Q, x2)

    # visual_adapter (nn.Linear): one-shot (1,C)x(C,C) GEMV + bias in plain XLA so the
    # weight never occupies kernel VMEM for the whole reduction.
    return pooled @ W.astype(jnp.float32).T + b.astype(jnp.float32)[None, :]


def vlfan_reference(X, Q, W, b):
    def l2n(v):
        n = jnp.sqrt(jnp.sum(v * v, axis=-1, keepdims=True))
        return v / jnp.maximum(n, NORM_EPS)
    Qn = l2n(Q.astype(jnp.float32))
    Xn = l2n(X[0].astype(jnp.float32))
    A_ = COATTN_SCALE * (Qn @ Xn.T)
    A = jax.nn.softmax(A_, axis=-1)
    out = A @ X[0].astype(jnp.float32)
    pooled = jnp.mean(out, axis=0, keepdims=True)
    return pooled @ W.astype(jnp.float32).T + b.astype(jnp.float32)[None, :]


if __name__ == "__main__":
    # Small shapes consistent with forward: B=1 (asserted by module), N instances,
    # C feature dim, num_query=10 (module default). N=200 with tile_n=128 exercises
    # the multi-tile online-softmax path and the ragged-last-tile masking.
    B, N, C, NQ = 1, 200, 128, 10

    key = jax.random.PRNGKey(0)
    k_x, k_q, k_w, k_b = jax.random.split(key, 4)

    X = jax.random.normal(k_x, (B, N, C), dtype=jnp.float32)
    # self.Q = nn.Parameter(torch.randn(num_query, dim_in))
    Q = jax.random.normal(k_q, (NQ, C), dtype=jnp.float32)
    # visual_adapter = nn.Linear(dim_in, dim_in): uniform(-1/sqrt(C), 1/sqrt(C)) init
    bound = 1.0 / np.sqrt(C)
    W = jax.random.uniform(k_w, (C, C), minval=-bound, maxval=bound, dtype=jnp.float32)
    b = jax.random.uniform(k_b, (C,), minval=-bound, maxval=bound, dtype=jnp.float32)

    out = vlfan_forward(X, Q, W, b, tile_n=128)   # force multi-tile streamed path
    out = jax.block_until_ready(out)

    ref = jax.block_until_ready(vlfan_reference(X, Q, W, b))
    # All-f32 math with exact reciprocal at finalize -> tight tolerance.
    np.testing.assert_allclose(np.asarray(out), np.asarray(ref), rtol=3e-4, atol=3e-4)

    print("KERNEL_OK")
</pallas_src>

<mosaic_0001>
module attributes {stable_mosaic.version = 11 : i64} {
  func.func @vlfan_kernel(%arg0: i32, %arg1: memref<1xi32, #tpu.memory_space<smem>>, %arg2: memref<10x128xf32, #tpu.memory_space<vmem>>, %arg3: memref<128x128xf32, #tpu.memory_space<vmem>>, %arg4: memref<1x128xf32, #tpu.memory_space<vmem>>, %arg5: memref<10x1xf32, #tpu.memory_space<vmem>>, %arg6: memref<10x1xf32, #tpu.memory_space<vmem>>, %arg7: memref<10x128xf32, #tpu.memory_space<vmem>>, %arg8: memref<10x128xf32, #tpu.memory_space<vmem>>) attributes {dimension_semantics = [#tpu.dimension_semantics<arbitrary>], iteration_bounds = array<i64: 2>, scalar_prefetch = 1 : i64, scratch_operands = 4 : i64, tpu.core_type = #tpu.core_type<tc>, window_params = [{pipeline_mode = #tpu.pipeline_mode<synchronous>, transform_indices = @transform_0, window_bounds = array<i64: 10, 128>}, {transform_indices = @transform_1, window_bounds = array<i64: 128, 128>}, {pipeline_mode = #tpu.pipeline_mode<synchronous>, transform_indices = @transform_2, window_bounds = array<i64: 1, 128>}]} {
    %c0_i32 = arith.constant 0 : i32
    %0 = arith.cmpi eq, %arg0, %c0_i32 : i32
    %1 = arith.extui %0 : i1 to i32
    %c0_i32_0 = arith.constant 0 : i32
    %2 = arith.cmpi ne, %1, %c0_i32_0 : i32
    scf.if %2 {
      %cst_26 = arith.constant 0xFF800000 : f32
      %52 = vector.broadcast %cst_26 : f32 to vector<10x1xf32>
      %c0_27 = arith.constant 0 : index
      %c0_28 = arith.constant 0 : index
      %53 = vector.load %arg5[%c0_27, %c0_28] : memref<10x1xf32, #tpu.memory_space<vmem>>, vector<10x1xf32>
      tpu.vector_store %arg5[%c0_27, %c0_28], %52 {strides = array<i32>} : memref<10x1xf32, #tpu.memory_space<vmem>>, vector<10x1xf32>,
      %cst_29 = arith.constant 0.000000e+00 : f32
      %54 = vector.broadcast %cst_29 : f32 to vector<10x1xf32>
      %c0_30 = arith.constant 0 : index
      %c0_31 = arith.constant 0 : index
      %55 = vector.load %arg6[%c0_30, %c0_31] : memref<10x1xf32, #tpu.memory_space<vmem>>, vector<10x1xf32>
      tpu.vector_store %arg6[%c0_30, %c0_31], %54 {strides = array<i32>} : memref<10x1xf32, #tpu.memory_space<vmem>>, vector<10x1xf32>,
      %cst_32 = arith.constant 0.000000e+00 : f32
      %56 = vector.broadcast %cst_32 : f32 to vector<10x128xf32>
      %c0_33 = arith.constant 0 : index
      %c0_34 = arith.constant 0 : index
      %57 = vector.load %arg7[%c0_33, %c0_34] : memref<10x128xf32, #tpu.memory_space<vmem>>, vector<10x128xf32>
      tpu.vector_store %arg7[%c0_33, %c0_34], %56 {strides = array<i32>} : memref<10x128xf32, #tpu.memory_space<vmem>>, vector<10x128xf32>,
      %c0_35 = arith.constant 0 : index
      %c0_36 = arith.constant 0 : index
      %58 = vector.load %arg2[%c0_35, %c0_36] : memref<10x128xf32, #tpu.memory_space<vmem>>, vector<10x128xf32>
      %59 = arith.mulf %58, %58 : vector<10x128xf32>
      %cst_37 = arith.constant dense<0.000000e+00> : vector<10xf32>
      %60 = vector.multi_reduction <add>, %59, %cst_37 [1] : vector<10x128xf32> to vector<10xf32>
      %61 = vector.shape_cast %60 : vector<10xf32> to vector<10x1xf32>
      %cst_38 = arith.constant 1.000000e-24 : f32
      %62 = vector.broadcast %cst_38 : f32 to vector<10x1xf32>
      %63 = arith.maximumf %61, %62 : vector<10x1xf32>
      %64 = math.rsqrt %63 : vector<10x1xf32>
      %65 = vector.broadcast %64 : vector<10x1xf32> to vector<10x128xf32>
      %66 = arith.mulf %58, %65 : vector<10x128xf32>
      %cst_39 = arith.constant 1.000000e+02 : f32
      %67 = vector.broadcast %cst_39 : f32 to vector<10x128xf32>
      %68 = arith.mulf %66, %67 : vector<10x128xf32>
      %c0_40 = arith.constant 0 : index
      %c0_41 = arith.constant 0 : index
      %69 = vector.load %arg8[%c0_40, %c0_41] : memref<10x128xf32, #tpu.memory_space<vmem>>, vector<10x128xf32>
      tpu.vector_store %arg8[%c0_40, %c0_41], %68 {strides = array<i32>} : memref<10x128xf32, #tpu.memory_space<vmem>>, vector<10x128xf32>,
    } else {
    }
    %c0 = arith.constant 0 : index
    %c0_1 = arith.constant 0 : index
    %3 = vector.load %arg3[%c0, %c0_1] : memref<128x128xf32, #tpu.memory_space<vmem>>, vector<128x128xf32>
    %4 = arith.mulf %3, %3 : vector<128x128xf32>
    %cst = arith.constant dense<0.000000e+00> : vector<128xf32>
    %5 = vector.multi_reduction <add>, %4, %cst [1] : vector<128x128xf32> to vector<128xf32>
    %6 = vector.shape_cast %5 : vector<128xf32> to vector<128x1xf32>
    %cst_2 = arith.constant 1.000000e-24 : f32
    %7 = vector.broadcast %cst_2 : f32 to vector<128x1xf32>
    %8 = arith.maximumf %6, %7 : vector<128x1xf32>
    %9 = math.rsqrt %8 : vector<128x1xf32>
    %10 = vector.broadcast %9 : vector<128x1xf32> to vector<128x128xf32>
    %11 = arith.mulf %3, %10 : vector<128x128xf32>
    %c0_3 = arith.constant 0 : index
    %c0_4 = arith.constant 0 : index
    %12 = vector.load %arg8[%c0_3, %c0_4] : memref<10x128xf32, #tpu.memory_space<vmem>>, vector<10x128xf32>
    %cst_5 = arith.constant dense<0.000000e+00> : vector<10x128xf32>
    %13 = tpu.matmul %12, %11, %cst_5 {dimension_numbers = #tpu.dot_dimension_numbers<[1], [1], [0], [0], [0, 0, 1, 0], [], []>} : vector<10x128xf32>, vector<128x128xf32>, vector<10x128xf32> -> vector<10x128xf32>
    %14 = tpu.iota {dimensions = array<i32: 1>} : vector<10x128xi32>
    %c128_i32 = arith.constant 128 : i32
    %15 = arith.muli %arg0, %c128_i32 : i32
    %16 = vector.broadcast %15 : i32 to vector<10x128xi32>
    %17 = arith.addi %14, %16 : vector<10x128xi32>
    %c0_6 = arith.constant 0 : index
    %18 = memref.load %arg1[%c0_6] : memref<1xi32, #tpu.memory_space<smem>>
    %19 = vector.broadcast %18 : i32 to vector<10x128xi32>
    %20 = arith.cmpi slt, %17, %19 : vector<10x128xi32>
    %cst_7 = arith.constant 0xFF800000 : f32
    %21 = vector.broadcast %cst_7 : f32 to vector<10x128xf32>
    %22 = arith.select %20, %13, %21 : vector<10x128xi1>, vector<10x128xf32>
    %c0_8 = arith.constant 0 : index
    %c0_9 = arith.constant 0 : index
    %23 = vector.load %arg5[%c0_8, %c0_9] : memref<10x1xf32, #tpu.memory_space<vmem>>, vector<10x1xf32>
    %cst_10 = arith.constant dense<0xFF800000> : vector<10xf32>
    %24 = vector.multi_reduction <maximumf>, %22, %cst_10 [1] : vector<10x128xf32> to vector<10xf32>
    %25 = vector.shape_cast %24 : vector<10xf32> to vector<10x1xf32>
    %26 = arith.maximumf %23, %25 : vector<10x1xf32>
    %cst_11 = arith.constant 0xFF800000 : f32
    %27 = vector.broadcast %cst_11 : f32 to vector<10x1xf32>
    %28 = arith.cmpf oeq, %26, %27 : vector<10x1xf32>
    %cst_12 = arith.constant 0.000000e+00 : f32
    %29 = vector.broadcast %cst_12 : f32 to vector<10x1xf32>
    %30 = arith.select %28, %29, %26 : vector<10x1xi1>, vector<10x1xf32>
    %31 = arith.subf %23, %30 : vector<10x1xf32>
    %32 = math.exp %31 : vector<10x1xf32>
    %33 = vector.broadcast %30 : vector<10x1xf32> to vector<10x128xf32>
    %34 = arith.subf %22, %33 : vector<10x128xf32>
    %35 = math.exp %34 : vector<10x128xf32>
    %c0_13 = arith.constant 0 : index
    %c0_14 = arith.constant 0 : index
    %36 = vector.load %arg6[%c0_13, %c0_14] : memref<10x1xf32, #tpu.memory_space<vmem>>, vector<10x1xf32>
    %37 = arith.mulf %32, %36 : vector<10x1xf32>
    %cst_15 = arith.constant dense<0.000000e+00> : vector<10xf32>
    %38 = vector.multi_reduction <add>, %35, %cst_15 [1] : vector<10x128xf32> to vector<10xf32>
    %39 = vector.shape_cast %38 : vector<10xf32> to vector<10x1xf32>
    %40 = arith.addf %37, %39 : vector<10x1xf32>
    %c0_16 = arith.constant 0 : index
    %c0_17 = arith.constant 0 : index
    %41 = vector.load %arg6[%c0_16, %c0_17] : memref<10x1xf32, #tpu.memory_space<vmem>>, vector<10x1xf32>
    tpu.vector_store %arg6[%c0_16, %c0_17], %40 {strides = array<i32>} : memref<10x1xf32, #tpu.memory_space<vmem>>, vector<10x1xf32>,
    %c0_18 = arith.constant 0 : index
    %c0_19 = arith.constant 0 : index
    %42 = vector.load %arg7[%c0_18, %c0_19] : memref<10x128xf32, #tpu.memory_space<vmem>>, vector<10x128xf32>
    %43 = vector.broadcast %32 : vector<10x1xf32> to vector<10x128xf32>
    %44 = arith.mulf %43, %42 : vector<10x128xf32>
    %cst_20 = arith.constant dense<0.000000e+00> : vector<10x128xf32>
    %45 = tpu.matmul %35, %3, %cst_20 {dimension_numbers = #tpu.dot_dimension_numbers<[1], [0], [0], [1], [0, 0, 1, 1], [], []>} : vector<10x128xf32>, vector<128x128xf32>, vector<10x128xf32> -> vector<10x128xf32>
    %46 = arith.addf %44, %45 : vector<10x128xf32>
    %c0_21 = arith.constant 0 : index
    %c0_22 = arith.constant 0 : index
    %47 = vector.load %arg7[%c0_21, %c0_22] : memref<10x128xf32, #tpu.memory_space<vmem>>, vector<10x128xf32>
    tpu.vector_store %arg7[%c0_21, %c0_22], %46 {strides = array<i32>} : memref<10x128xf32, #tpu.memory_space<vmem>>, vector<10x128xf32>,
    %c0_23 = arith.constant 0 : index
    %c0_24 = arith.constant 0 : index
    %48 = vector.load %arg5[%c0_23, %c0_24] : memref<10x1xf32, #tpu.memory_space<vmem>>, vector<10x1xf32>
    tpu.vector_store %arg5[%c0_23, %c0_24], %26 {strides = array<i32>} : memref<10x1xf32, #tpu.memory_space<vmem>>, vector<10x1xf32>,
    %c1_i32 = arith.constant 1 : i32
    %49 = arith.cmpi eq, %arg0, %c1_i32 : i32
    %50 = arith.extui %49 : i1 to i32
    %c0_i32_25 = arith.constant 0 : i32
    %51 = arith.cmpi ne, %50, %c0_i32_25 : i32
    scf.if %51 {
      %c0_26 = arith.constant 0 : index
      %c0_27 = arith.constant 0 : index
      %52 = vector.load %arg7[%c0_26, %c0_27] : memref<10x128xf32, #tpu.memory_space<vmem>>, vector<10x128xf32>
      %c0_28 = arith.constant 0 : index
      %c0_29 = arith.constant 0 : index
      %53 = vector.load %arg6[%c0_28, %c0_29] : memref<10x1xf32, #tpu.memory_space<vmem>>, vector<10x1xf32>
      %54 = vector.broadcast %53 : vector<10x1xf32> to vector<10x128xf32>
      %55 = arith.divf %52, %54 : vector<10x128xf32>
      %cst_30 = arith.constant dense<0.000000e+00> : vector<128xf32>
      %56 = vector.multi_reduction <add>, %55, %cst_30 [0] : vector<10x128xf32> to vector<128xf32>
      %57 = vector.shape_cast %56 : vector<128xf32> to vector<1x128xf32>
      %cst_31 = arith.constant 1.000000e+01 : f32
      %58 = vector.broadcast %cst_31 : f32 to vector<1x128xf32>
      %59 = arith.divf %57, %58 : vector<1x128xf32>
      %c0_32 = arith.constant 0 : index
      %c0_33 = arith.constant 0 : index
      %60 = vector.load %arg4[%c0_32, %c0_33] : memref<1x128xf32, #tpu.memory_space<vmem>>, vector<1x128xf32>
      tpu.vector_store %arg4[%c0_32, %c0_33], %59 {strides = array<i32>} : memref<1x128xf32, #tpu.memory_space<vmem>>, vector<1x128xf32>,
    } else {
    }
    return
  }
  func.func @transform_0(%arg0: i32, %arg1: memref<1xi32, #tpu.memory_space<smem>>) -> (i32, i32) {
    %c0_i32 = arith.constant 0 : i32
    %c0_i32_0 = arith.constant 0 : i32
    %c0_i32_1 = arith.constant 0 : i32
    return %c0_i32, %c0_i32_0 : i32, i32
  }
  func.func @transform_1(%arg0: i32, %arg1: memref<1xi32, #tpu.memory_space<smem>>) -> (i32, i32) {
    %c0_i32 = arith.constant 0 : i32
    %c0_i32_0 = arith.constant 0 : i32
    return %arg0, %c0_i32 : i32, i32
  }
  func.func @transform_2(%arg0: i32, %arg1: memref<1xi32, #tpu.memory_space<smem>>) -> (i32, i32) {
    %c0_i32 = arith.constant 0 : i32
    %c0_i32_0 = arith.constant 0 : i32
    %c0_i32_1 = arith.constant 0 : i32
    return %c0_i32, %c0_i32_0 : i32, i32
  }
}

</mosaic_0001>

<llo_original>
// kernel: tpu_custom_call.1
$region0: #{tpu_custom_call.1}
  #allocation0 [shape = 'u32[]', space=smem, size = 0x4, offset = 0x4, fixed_abs, tag = 'smem constant byte address 0x4 - core index']
  #allocation1 [shape = 'u32[144,128]{1,0:T(1,128)}', space=vmem, size = 0x12000, scoped, tag = 'internal scratch']
  #allocation2 [shape = 'f32[10,1]{1,0:T(8,128)}', space=vmem, size = 0x2000, scoped, tag = 'scratch operand']
  #allocation3 [shape = 'f32[10,1]{1,0:T(8,128)}', space=vmem, size = 0x2000, scoped, tag = 'scratch operand']
  #allocation4 [shape = 'f32[10,128]{1,0:T(8,128)}', space=vmem, size = 0x2000, scoped, tag = 'scratch operand']
  #allocation5 [shape = 'f32[10,128]{1,0:T(8,128)}', space=vmem, size = 0x2000, scoped, tag = 'scratch operand']
  #allocation6 [shape = 's32[1]{0}', space=sflag, size = 0x4, scoped, tag = 'scoped memory for tpu_custom_call.1']
  #allocation7 [shape = 's32[1]{0:T(128)S(6)}', space=smem, size = 0x200, scoped, tag = 'prefetched SMEM operand 0']
  %s0 = inlined_call_operand.<no memory space> [shape: s32[1], index: 0, kind: input, shape index: {}]
  %s1 = inlined_call_operand.hbm [shape: f32[10,128], index: 1, kind: input, shape index: {}]
  %s2 = inlined_call_operand.hbm [shape: f32[256,128], index: 2, kind: input, shape index: {}]
  %s3 = inlined_call_operand.hbm [shape: f32[1,128], index: 3, kind: output, shape index: {}]
  %s4 = sld [smem:[#allocation0]]
  $region57: #{tpu_custom_call.1} parent=0
    _
  %s6 = ssub.s32 1, %s4
  %s7 = scalar_select 0, %s6, %s4
  %8 = sst [smem:[#allocation7]] %s0
  $region1: #{tpu_custom_call.1} parent=0
    #allocation8 [shape = 'u8[8192]{0}', space=vmem, size = 0x2000, scoped, tag = 'input window, operand 1, single buffered']
    #allocation9 [shape = 's32[2]{0}', space=sflag, size = 0x8, scoped, tag = 'scoped memory for tpu_custom_call.1']
    #allocation10 [shape = 's32[2]{0}', space=sflag, size = 0x8, scoped, tag = 'scoped memory for tpu_custom_call.1']
    #allocation11 [shape = 'u8[131072]{0}', space=vmem, size = 0x20000, scoped, tag = 'input window, operand 2']
    #allocation12 [shape = 's32[2]{0}', space=sflag, size = 0x8, scoped, tag = 'scoped memory for tpu_custom_call.1']
    #allocation13 [shape = 'u8[512]{0}', space=vmem, size = 0x400, scoped, tag = 'output window, operand 0, single buffered']
    %9 = vsyncpa [#allocation9], 0
    %10 = vsyncpa [#allocation12], 0
    %s11 = scalar_lea.sflag [#allocation12], 1
    %12 = vsyncpa %s11, 0
    %13 = vsyncpa [#allocation10], 0
    loop: start=0, step=1, limit=4
    $region2: #{tpu_custom_call.1} parent=1 // loop_pre_header
      _
    $region3: #{tpu_custom_call.1} parent=1 // loop_header
      %s15 = sphi 0, %s19
      %p16 = scmp.ge.s32.totalorder %s15, 4
      %s23 = sphi 0, %s23
      %s25 = sphi 0, %s23
      %s26 = sphi 0, %s25
      %s40 = sphi 0, %s26
      %s46 = sphi 0, %s48
      %s49 = sphi 0, %s46
      %s50 = sphi 0, %s49
      %s66 = sphi 0, %s50
      %s70 = sphi 0, %s70
      %s72 = sphi 0, %s70
      %s73 = sphi 0, %s72
      %s87 = sphi 0, %s73
    $region4: #{tpu_custom_call.1} parent=1 // loop_header_branch
      %18 = sbr.rel (%p16) target = $region8
    $region5: #{tpu_custom_call.1} parent=1 // loop_body
      %s20 = ssub.s32 %s15, 1
      %s21 = ssub.s32 %s15, 2
      %s22 = sadd.s32 %s15, 1
      %s24 = sadd.s32 %s23, 1
      %p27 = scmp.eq.s32.totalorder %s15, 1
      %p28 = scmp.ne.s32.totalorder %s23, %s25
      %p29 = scmp.eq.s32.totalorder %s15, 0
      %p30 = por %p28, %p29
      %p31 = scmp.ne.s32.totalorder %s23, %s25
      %p32 = scmp.eq.s32.totalorder %s20, 1
      %p33 = por %p31, %p32
      %p34 = scmp.ne.s32.totalorder %s25, %s26
      %p35 = scmp.eq.s32.totalorder %s20, 0
      %p36 = por %p34, %p35
      %p37 = scmp.ne.s32.totalorder %s25, %s26
      %p38 = scmp.eq.s32.totalorder %s21, 1
      %p39 = por %p37, %p38
      %p41 = scmp.ne.s32.totalorder %s26, %s40
      %p42 = scmp.eq.s32.totalorder %s21, 0
      %p43 = por %p41, %p42
      %s44 = ssub.s32 %s15, %s22
      %p45 = scmp.eq.s32.totalorder %s44, 0
      %s47 = sadd.s32 %s46, 1
      %s48 = scalar_select %p45, %s46, %s47
      %p51 = pneg %p45
      %p52 = scmp.eq.s32.totalorder %s15, 1
      %p53 = por %p51, %p52
      %p54 = scmp.ne.s32.totalorder %s46, %s49
      %p55 = scmp.eq.s32.totalorder %s15, 0
      %p56 = por %p54, %p55
      %p57 = scmp.ne.s32.totalorder %s46, %s49
      %p58 = scmp.eq.s32.totalorder %s20, 1
      %p59 = por %p57, %p58
      %p60 = scmp.ne.s32.totalorder %s49, %s50
      %p61 = scmp.eq.s32.totalorder %s20, 0
      %p62 = por %p60, %p61
      %p63 = scmp.ne.s32.totalorder %s49, %s50
      %p64 = scmp.eq.s32.totalorder %s21, 1
      %p65 = por %p63, %p64
      %p67 = scmp.ne.s32.totalorder %s50, %s66
      %p68 = scmp.eq.s32.totalorder %s21, 0
      %p69 = por %p67, %p68
      %s71 = sadd.s32 %s70, 1
      %p74 = scmp.eq.s32.totalorder %s15, 1
      %p75 = scmp.ne.s32.totalorder %s70, %s72
      %p76 = scmp.eq.s32.totalorder %s15, 0
      %p77 = por %p75, %p76
      %p78 = scmp.ne.s32.totalorder %s70, %s72
      %p79 = scmp.eq.s32.totalorder %s20, 1
      %p80 = por %p78, %p79
      %p81 = scmp.ne.s32.totalorder %s72, %s73
      %p82 = scmp.eq.s32.totalorder %s20, 0
      %p83 = por %p81, %p82
      %p84 = scmp.ne.s32.totalorder %s72, %s73
      %p85 = scmp.eq.s32.totalorder %s21, 1
      %p86 = por %p84, %p85
      %p88 = scmp.ne.s32.totalorder %s73, %s87
      %p89 = scmp.eq.s32.totalorder %s21, 0
      %p90 = por %p88, %p89
      %p91 = scmp.le.s32.totalorder 1, %s15
      %p92 = scmp.lt.s32.totalorder %s15, 3
      %p93 = pnand %p91, %p92
      %p94 = pneg %p93
      // Predicated region
      $region9: #{tpu_custom_call.1} parent=5 // pred_check
        _
      $region10: #{tpu_custom_call.1} parent=5 // pred_check_branch
        %96 = sbr.rel (%p93) target = $region12
      $region11: #{tpu_custom_call.1} parent=5 // pred_region
        %s97 = ssub.s32 %s15, 1
        // Predicated region
        $region13: #{tpu_custom_call.1} parent=11 // pred_check
          %p98 = pneg %p36
        $region14: #{tpu_custom_call.1} parent=11 // pred_check_branch
          %100 = sbr.rel (%p98) target = $region16
        $region15: #{tpu_custom_call.1} parent=11 // pred_region
          %s102 = ssub.s32 256, 256
          %103 = vsyncadd [#allocation9], %s102
          %s104 = sshll.u32 [#allocation8], 4
          %s105 = int_to_ptr.vmem [resolvable:$true] %s104
          %110 = dma.hbm_to_vmem [thread:$0]  %s1, 256, %s105, [#allocation9], 128, 128, 8
        $region16: #{tpu_custom_call.1} parent=11 // pred_fallthru
          _
      $region12: #{tpu_custom_call.1} parent=5 // pred_fallthru
        _
      %p111 = scmp.lt.s32.totalorder %s15, 2
      // Predicated region
      $region17: #{tpu_custom_call.1} parent=5 // pred_check
        %p112 = pneg %p111
      $region18: #{tpu_custom_call.1} parent=5 // pred_check_branch
        %114 = sbr.rel (%p112) target = $region20
      $region19: #{tpu_custom_call.1} parent=5 // pred_region
        // Predicated region
        $region21: #{tpu_custom_call.1} parent=19 // pred_check
          %p115 = pneg %p56
        $region22: #{tpu_custom_call.1} parent=19 // pred_check_branch
          %117 = sbr.rel (%p115) target = $region24
        $region23: #{tpu_custom_call.1} parent=19 // pred_region
          %s118 = sand.u32 %s46, 1
          %s119 = scalar_lea.sflag [#allocation12], %s118
          %s120 = sand.u32 %s46, 1
          %s121 = smul.addr %s120, 128
          %s122 = scalar_lea.vmem [#allocation11], %s121
          %s123 = smul.u32 16, %s15
          %s125 = ssub.s32 2048, 2048
          %126 = vsyncadd %s119, %s125
          %s127 = smul.addr %s123, 128
          %s128 = scalar_lea.hbm %s2, %s127
          %s129 = sshll.u32 %s122, 4
          %s130 = int_to_ptr.vmem [resolvable:$true] %s129
          %135 = dma.hbm_to_vmem [thread:$0]  %s128, 2048, %s130, %s119, 128, 128, 8
        $region24: #{tpu_custom_call.1} parent=19 // pred_fallthru
          _
      $region20: #{tpu_custom_call.1} parent=5 // pred_fallthru
        _
      %p136 = scmp.le.s32.totalorder 1, %s15
      %p137 = scmp.lt.s32.totalorder %s15, 3
      %p138 = pnand %p136, %p137
      %p139 = pneg %p138
      // Predicated region
      $region25: #{tpu_custom_call.1} parent=5 // pred_check
        _
      $region26: #{tpu_custom_call.1} parent=5 // pred_check_branch
        %141 = sbr.rel (%p138) target = $region28
      $region27: #{tpu_custom_call.1} parent=5 // pred_region
        %s142 = ssub.s32 %s15, 1
        // Predicated region
        $region29: #{tpu_custom_call.1} parent=27 // pred_check
          %p143 = pneg %p36
        $region30: #{tpu_custom_call.1} parent=27 // pred_check_branch
          %145 = sbr.rel (%p143) target = $region32
        $region31: #{tpu_custom_call.1} parent=27 // pred_region
          %146 = dma.done [#allocation9], 256
        $region32: #{tpu_custom_call.1} parent=27 // pred_fallthru
          _
        %s147 = sand.u32 %s49, 1
        %s148 = scalar_lea.sflag [#allocation12], %s147
        %s149 = sand.u32 %s49, 1
        %s150 = smul.addr %s149, 128
        %s151 = scalar_lea.vmem [#allocation11], %s150
        // Predicated region
        $region33: #{tpu_custom_call.1} parent=27 // pred_check
          %p152 = pneg %p62
        $region34: #{tpu_custom_call.1} parent=27 // pred_check_branch
          %154 = sbr.rel (%p152) target = $region36
        $region35: #{tpu_custom_call.1} parent=27 // pred_region
          %155 = dma.done %s148, 2048
        $region36: #{tpu_custom_call.1} parent=27 // pred_fallthru
          _
        %p156 = pneg %p36
        %p157 = pneg %p33
        %s158 = sand.u32 %s49, 1
        %s159 = scalar_lea.sflag [#allocation12], %s158
        %s160 = sand.u32 %s49, 1
        %s161 = smul.addr %s160, 128
        %s162 = scalar_lea.vmem [#allocation11], %s161
        %p163 = pneg %p62
        %p164 = pneg %p59
        %p165 = pneg %p83
        %p166 = pneg %p80
        %s167 = smul.u32 16, %s20
        %p168 = scmp.eq.s32.totalorder %s20, 0
        // Predicated region
        $region37: #{tpu_custom_call.1} parent=27 // pred_check
          %p169 = pneg %p168
        $region38: #{tpu_custom_call.1} parent=27 // pred_check_branch
          %171 = sbr.rel (%p169) target = $region40
        $region39: #{tpu_custom_call.1} parent=27 // pred_region
          %vm172 = vcmask 7168
          %173 = vst.msk [vmem:[#allocation2] sm:$0xff] %vm172, -inf
          %vm174 = vcmask 1024
          %175 = vst.msk [vmem:[#allocation2 + $0x8] sm:$0x3] %vm174, -inf
          %176 = vst.msk [vmem:[#allocation3] sm:$0xff] %vm172, 0.0
          %177 = vst.msk [vmem:[#allocation3 + $0x8] sm:$0x3] %vm174, 0.0
          %178 = vst [vmem:[#allocation4] sm:$0xff] 0.0
          %179 = vst [vmem:[#allocation4 + $0x8] sm:$0x3] 0.0
          %v180 = vld [vmem:[#allocation8] sm:$0xff]
          %v181 = vld [vmem:[#allocation8 + $0x8] sm:$0x3]
          %v182 = vmul.f32 %v180, %v180
          %v183 = vmul.f32 %v181, %v181
          %184 = vadd.xlane.f32.xlu0 %v182
          %v185 = vpop.xlane.xlu0 %184
          %vm186 = vcmask 1041408
          %v187 = vsel %vm186, %v183, 0.0
          %188 = vadd.xlane.f32.xlu0 %v187
          %v189 = vpop.xlane.xlu0 %188
          %v190 = vmax.f32 %v185, 1e-24
          %v191 = vmax.f32 %v189, 1e-24
          %v192 = vrsqrt.pop %v190
          %v193 = vrsqrt.pop %v191
          %v194 = vmul.f32 %v180, %v192
          %v195 = vmul.f32 %v181, %v193
          %v196 = vmul.f32 %v194, 100.0
          %v197 = vmul.f32 %v195, 100.0
          %198 = vst [vmem:[#allocation5] sm:$0xff] %v196
          %199 = vst [vmem:[#allocation5 + $0x8] sm:$0x3] %v197
        $region40: #{tpu_custom_call.1} parent=27 // pred_fallthru
          _
        %v200 = vld [vmem:[%s151] sm:$0xff]
        %v201 = vld [vmem:[%s151 + $0x8] sm:$0xff]
        %v202 = vld [vmem:[%s151 + $0x10] sm:$0xff]
        %v203 = vld [vmem:[%s151 + $0x18] sm:$0xff]
        %v204 = vld [vmem:[%s151 + $0x20] sm:$0xff]
        %v205 = vld [vmem:[%s151 + $0x28] sm:$0xff]
        %v206 = vld [vmem:[%s151 + $0x30] sm:$0xff]
        %v207 = vld [vmem:[%s151 + $0x38] sm:$0xff]
        %v208 = vld [vmem:[%s151 + $0x40] sm:$0xff]
        %v209 = vld [vmem:[%s151 + $0x48] sm:$0xff]
        %v210 = vld [vmem:[%s151 + $0x50] sm:$0xff]
        %v211 = vld [vmem:[%s151 + $0x58] sm:$0xff]
        %v212 = vld [vmem:[%s151 + $0x60] sm:$0xff]
        %v213 = vld [vmem:[%s151 + $0x68] sm:$0xff]
        %v214 = vld [vmem:[%s151 + $0x70] sm:$0xff]
        %v215 = vld [vmem:[%s151 + $0x78] sm:$0xff]
        %v216 = vmul.f32 %v200, %v200
        %v217 = vmul.f32 %v201, %v201
        %v218 = vmul.f32 %v202, %v202
        %v219 = vmul.f32 %v203, %v203
        %v220 = vmul.f32 %v204, %v204
        %v221 = vmul.f32 %v205, %v205
        %v222 = vmul.f32 %v206, %v206
        %v223 = vmul.f32 %v207, %v207
        %v224 = vmul.f32 %v208, %v208
        %v225 = vmul.f32 %v209, %v209
        %v226 = vmul.f32 %v210, %v210
        %v227 = vmul.f32 %v211, %v211
        %v228 = vmul.f32 %v212, %v212
        %v229 = vmul.f32 %v213, %v213
        %v230 = vmul.f32 %v214, %v214
        %v231 = vmul.f32 %v215, %v215
        %232 = vadd.xlane.f32.xlu0 %v216
        %v233 = vpop.xlane.xlu0 %232
        %234 = vadd.xlane.f32.xlu0 %v217
        %v235 = vpop.xlane.xlu0 %234
        %236 = vadd.xlane.f32.xlu0 %v218
        %v237 = vpop.xlane.xlu0 %236
        %238 = vadd.xlane.f32.xlu0 %v219
        %v239 = vpop.xlane.xlu0 %238
        %240 = vadd.xlane.f32.xlu0 %v220
        %v241 = vpop.xlane.xlu0 %240
        %242 = vadd.xlane.f32.xlu0 %v221
        %v243 = vpop.xlane.xlu0 %242
        %244 = vadd.xlane.f32.xlu0 %v222
        %v245 = vpop.xlane.xlu0 %244
        %246 = vadd.xlane.f32.xlu0 %v223
        %v247 = vpop.xlane.xlu0 %246
        %248 = vadd.xlane.f32.xlu0 %v224
        %v249 = vpop.xlane.xlu0 %248
        %250 = vadd.xlane.f32.xlu0 %v225
        %v251 = vpop.xlane.xlu0 %250
        %252 = vadd.xlane.f32.xlu0 %v226
        %v253 = vpop.xlane.xlu0 %252
        %254 = vadd.xlane.f32.xlu0 %v227
        %v255 = vpop.xlane.xlu0 %254
        %256 = vadd.xlane.f32.xlu0 %v228
        %v257 = vpop.xlane.xlu0 %256
        %258 = vadd.xlane.f32.xlu0 %v229
        %v259 = vpop.xlane.xlu0 %258
        %260 = vadd.xlane.f32.xlu0 %v230
        %v261 = vpop.xlane.xlu0 %260
        %262 = vadd.xlane.f32.xlu0 %v231
        %v263 = vpop.xlane.xlu0 %262
        %v264 = vmax.f32 %v233, 1e-24
        %v265 = vmax.f32 %v235, 1e-24
        %v266 = vmax.f32 %v237, 1e-24
        %v267 = vmax.f32 %v239, 1e-24
        %v268 = vmax.f32 %v241, 1e-24
        %v269 = vmax.f32 %v243, 1e-24
        %v270 = vmax.f32 %v245, 1e-24
        %v271 = vmax.f32 %v247, 1e-24
        %v272 = vmax.f32 %v249, 1e-24
        %v273 = vmax.f32 %v251, 1e-24
        %v274 = vmax.f32 %v253, 1e-24
        %v275 = vmax.f32 %v255, 1e-24
        %v276 = vmax.f32 %v257, 1e-24
        %v277 = vmax.f32 %v259, 1e-24
        %v278 = vmax.f32 %v261, 1e-24
        %v279 = vmax.f32 %v263, 1e-24
        %v280 = vrsqrt.pop %v264
        %v281 = vrsqrt.pop %v265
        %v282 = vrsqrt.pop %v266
        %v283 = vrsqrt.pop %v267
        %v284 = vrsqrt.pop %v268
        %v285 = vrsqrt.pop %v269
        %v286 = vrsqrt.pop %v270
        %v287 = vrsqrt.pop %v271
        %v288 = vrsqrt.pop %v272
        %v289 = vrsqrt.pop %v273
        %v290 = vrsqrt.pop %v274
        %v291 = vrsqrt.pop %v275
        %v292 = vrsqrt.pop %v276
        %v293 = vrsqrt.pop %v277
        %v294 = vrsqrt.pop %v278
        %v295 = vrsqrt.pop %v279
        %v296 = vmul.f32 %v200, %v280
        %v297 = vmul.f32 %v201, %v281
        %v298 = vmul.f32 %v202, %v282
        %v299 = vmul.f32 %v203, %v283
        %v300 = vmul.f32 %v204, %v284
        %v301 = vmul.f32 %v205, %v285
        %v302 = vmul.f32 %v206, %v286
        %v303 = vmul.f32 %v207, %v287
        %v304 = vmul.f32 %v208, %v288
        %v305 = vmul.f32 %v209, %v289
        %v306 = vmul.f32 %v210, %v290
        %v307 = vmul.f32 %v211, %v291
        %v308 = vmul.f32 %v212, %v292
        %v309 = vmul.f32 %v213, %v293
        %v310 = vmul.f32 %v214, %v294
        %v311 = vmul.f32 %v215, %v295
        %v312 = vld [vmem:[#allocation5] sm:$0xff]
        %v313 = vld [vmem:[#allocation5 + $0x8] sm:$0x3]
        %314 = vmatprep.subr.mxu0 0.0
        %315 = vmatpush1.xpose.msra.mxu0 %v296
        %316 = vmatprep.subr.mxu0 0.0
        %317 = vmatpush1.xpose.msra.mxu0 %v297
        %318 = vmatprep.subr.mxu0 0.0
        %319 = vmatpush1.xpose.msra.mxu0 %v298
        %320 = vmatprep.subr.mxu0 0.0
        %321 = vmatpush1.xpose.msra.mxu0 %v299
        %322 = vmatprep.subr.mxu0 0.0
        %323 = vmatpush1.xpose.msra.mxu0 %v300
        %324 = vmatprep.subr.mxu0 0.0
        %325 = vmatpush1.xpose.msra.mxu0 %v301
        %326 = vmatprep.subr.mxu0 0.0
        %327 = vmatpush1.xpose.msra.mxu0 %v302
        %328 = vmatprep.subr.mxu0 0.0
        %329 = vmatpush1.xpose.msra.mxu0 %v303
        %330 = vmatprep.subr.mxu0 0.0
        %331 = vmatpush1.xpose.msra.mxu0 %v304
        %332 = vmatprep.subr.mxu0 0.0
        %333 = vmatpush1.xpose.msra.mxu0 %v305
        %334 = vmatprep.subr.mxu0 0.0
        %335 = vmatpush1.xpose.msra.mxu0 %v306
        %336 = vmatprep.subr.mxu0 0.0
        %337 = vmatpush1.xpose.msra.mxu0 %v307
        %338 = vmatprep.subr.mxu0 0.0
        %339 = vmatpush1.xpose.msra.mxu0 %v308
        %340 = vmatprep.subr.mxu0 0.0
        %341 = vmatpush1.xpose.msra.mxu0 %v309
        %342 = vmatprep.subr.mxu0 0.0
        %343 = vmatpush1.xpose.msra.mxu0 %v310
        %344 = vmatprep.subr.mxu0 0.0
        %345 = vmatpush1.xpose.msra.mxu0 %v311
        %346 = vmatprep.subr.mxu0 0.0
        %347 = vmatpush1.xpose.msra.mxu0 0.0
        %348 = vmatprep.subr.mxu0 0.0
        %349 = vmatpush1.xpose.msra.mxu0 0.0
        %350 = vmatprep.subr.mxu0 0.0
        %351 = vmatpush1.xpose.msra.mxu0 0.0
        %352 = vmatprep.subr.mxu0 0.0
        %353 = vmatpush1.xpose.msra.mxu0 0.0
        %354 = vmatprep.subr.mxu0 0.0
        %355 = vmatpush1.xpose.msra.mxu0 0.0
        %356 = vmatprep.subr.mxu0 0.0
        %357 = vmatpush1.xpose.msra.mxu0 0.0
        %358 = vmatprep.subr.mxu0 0.0
        %359 = vmatpush1.xpose.msra.mxu0 0.0
        %360 = vmatprep.subr.mxu0 0.0
        %361 = vmatpush1.xpose.msra.mxu0 0.0
        %362 = vmatprep.subr.mxu0 0.0
        %363 = vmatpush1.xpose.msra.mxu0 0.0
        %364 = vmatprep.subr.mxu0 0.0
        %365 = vmatpush1.xpose.msra.mxu0 0.0
        %366 = vmatprep.subr.mxu0 0.0
        %367 = vmatpush1.xpose.msra.mxu0 0.0
        %368 = vmatprep.subr.mxu0 0.0
        %369 = vmatpush1.xpose.msra.mxu0 0.0
        %370 = vmatprep.subr.mxu0 0.0
        %371 = vmatpush1.xpose.msra.mxu0 0.0
        %372 = vmatprep.subr.mxu0 0.0
        %373 = vmatpush1.xpose.msra.mxu0 0.0
        %374 = vmatprep.subr.mxu0 0.0
        %375 = vmatpush1.xpose.msra.mxu0 0.0
        %376 = vmatprep.subr.mxu0 0.0
        %377 = vmatpush1.xpose.msra.mxu0 0.0
        %378 = vmatprep.mubr.f32.mxu0 0.0
        %379 = vmatmul.mubr.f32.gmra.mrb[0].mxu0 %v312
        %v380 = vpop.f32.mrb[0].mxu0
        %v381 = vadd.f32 0.0, %v380
        %v382 = vpop.f32.mrb[0].mxu0
        %383 = vmatprep.mubr.f32.mxu0 0.0
        %384 = vmatmul.mubr.f32.gmra.mrb[0].mxu0 %v313
        %v385 = vpop.f32.mrb[0].mxu0
        %v386 = vadd.f32 0.0, %v385
        %v387 = vpop.f32.mrb[0].mxu0
        %388 = vdwg.mxu0
        %v389 = vlaneseq
        %v390 = vand.u32 %v389, 127
        %s391 = smul.u32 %s20, 128
        %v392 = vstv %s391
        %v393 = vadd.s32 %v390, %v392
        %s394 = sld [smem:[#allocation7]]
        %v395 = vstv %s394
        %vm396 = vcmp.lt.s32.totalorder %v393, %v395
        %v397 = vsel %vm396, %v381, -inf
        %v398 = vsel %vm396, %v386, -inf
        %v399 = vld [vmem:[#allocation2] sm:$0xff]
        %v400 = vld [vmem:[#allocation2 + $0x8] sm:$0x3]
        %401 = vmax.xlane.f32.xlu0 %v397
        %v402 = vpop.xlane.xlu0 %401
        %vm403 = vcmask 1041408
        %v404 = vsel %vm403, %v398, -inf
        %405 = vmax.xlane.f32.xlu0 %v404
        %v406 = vpop.xlane.xlu0 %405
        %v407 = vmax.f32 %v399, %v402
        %v408 = vmax.f32 %v400, %v406
        %vm409 = vcmp.eq.f32.partialorder %v407, -inf
        %vm410 = vcmp.eq.f32.partialorder %v408, -inf
        %v411 = vsel %vm409, 0.0, %v407
        %v412 = vsel %vm410, 0.0, %v408
        %v413 = vsub.f32 %v399, %v411
        %v414 = vsub.f32 %v400, %v412
        %v415 = vmul.f32 %v413, 1.442695
        %v416 = vpow.pop %v415
        %v417 = vmul.f32 %v414, 1.442695
        %v418 = vpow.pop %v417
        %420 = vset.pattern.permute.xlu0 0
        %421 = vperm.xlu0 %420, %v411
        %v422 = vpop.permute.xlu0 %421
        %425 = vset.pattern.permute.xlu0 0
        %426 = vperm.xlu0 %425, %v412
        %v427 = vpop.permute.xlu0 %426
        %v429 = vsub.f32 %v397, %v422
        %v430 = vsub.f32 %v398, %v427
        %v431 = vmul.f32 %v429, 1.442695
        %v432 = vpow.pop %v431
        %v433 = vmul.f32 %v430, 1.442695
        %v434 = vpow.pop %v433
        %v435 = vld [vmem:[#allocation3] sm:$0xff]
        %v436 = vld [vmem:[#allocation3 + $0x8] sm:$0x3]
        %v437 = vmul.f32 %v416, %v435
        %v438 = vmul.f32 %v418, %v436
        %439 = vadd.xlane.f32.xlu0 %v432
        %v440 = vpop.xlane.xlu0 %439
        %v441 = vsel %vm403, %v434, 0.0
        %442 = vadd.xlane.f32.xlu0 %v441
        %v443 = vpop.xlane.xlu0 %442
        %v444 = vadd.f32 %v437, %v440
        %v445 = vadd.f32 %v438, %v443
        %vm446 = vcmask 7168
        %447 = vst.msk [vmem:[#allocation3] sm:$0xff] %vm446, %v444
        %vm448 = vcmask 1024
        %449 = vst.msk [vmem:[#allocation3 + $0x8] sm:$0x3] %vm448, %v445
        %v450 = vld [vmem:[#allocation4] sm:$0xff]
        %v451 = vld [vmem:[#allocation4 + $0x8] sm:$0x3]
        %453 = vset.pattern.permute.xlu0 0
        %454 = vperm.xlu0 %453, %v416
        %v455 = vpop.permute.xlu0 %454
        %458 = vset.pattern.permute.xlu0 0
        %459 = vperm.xlu0 %458, %v418
        %v460 = vpop.permute.xlu0 %459
        %v462 = vmul.f32 %v455, %v450
        %v463 = vmul.f32 %v460, %v451
        %464 = vmatprep.subr.mxu0 0.0
        %465 = vmatpush1.msra.mxu0 %v200
        %466 = vmatprep.subr.mxu0 0.0
        %467 = vmatpush1.msra.mxu0 %v201
        %468 = vmatprep.subr.mxu0 0.0
        %469 = vmatpush1.msra.mxu0 %v202
        %470 = vmatprep.subr.mxu0 0.0
        %471 = vmatpush1.msra.mxu0 %v203
        %472 = vmatprep.subr.mxu0 0.0
        %473 = vmatpush1.msra.mxu0 %v204
        %474 = vmatprep.subr.mxu0 0.0
        %475 = vmatpush1.msra.mxu0 %v205
        %476 = vmatprep.subr.mxu0 0.0
        %477 = vmatpush1.msra.mxu0 %v206
        %478 = vmatprep.subr.mxu0 0.0
        %479 = vmatpush1.msra.mxu0 %v207
        %480 = vmatprep.subr.mxu0 0.0
        %481 = vmatpush1.msra.mxu0 %v208
        %482 = vmatprep.subr.mxu0 0.0
        %483 = vmatpush1.msra.mxu0 %v209
        %484 = vmatprep.subr.mxu0 0.0
        %485 = vmatpush1.msra.mxu0 %v210
        %486 = vmatprep.subr.mxu0 0.0
        %487 = vmatpush1.msra.mxu0 %v211
        %488 = vmatprep.subr.mxu0 0.0
        %489 = vmatpush1.msra.mxu0 %v212
        %490 = vmatprep.subr.mxu0 0.0
        %491 = vmatpush1.msra.mxu0 %v213
        %492 = vmatprep.subr.mxu0 0.0
        %493 = vmatpush1.msra.mxu0 %v214
        %494 = vmatprep.subr.mxu0 0.0
        %495 = vmatpush1.msra.mxu0 %v215
        %496 = vmatprep.subr.mxu0 0.0
        %497 = vmatpush1.msra.mxu0 0.0
        %498 = vmatprep.subr.mxu0 0.0
        %499 = vmatpush1.msra.mxu0 0.0
        %500 = vmatprep.subr.mxu0 0.0
        %501 = vmatpush1.msra.mxu0 0.0
        %502 = vmatprep.subr.mxu0 0.0
        %503 = vmatpush1.msra.mxu0 0.0
        %504 = vmatprep.subr.mxu0 0.0
        %505 = vmatpush1.msra.mxu0 0.0
        %506 = vmatprep.subr.mxu0 0.0
        %507 = vmatpush1.msra.mxu0 0.0
        %508 = vmatprep.subr.mxu0 0.0
        %509 = vmatpush1.msra.mxu0 0.0
        %510 = vmatprep.subr.mxu0 0.0
        %511 = vmatpush1.msra.mxu0 0.0
        %512 = vmatprep.subr.mxu0 0.0
        %513 = vmatpush1.msra.mxu0 0.0
        %514 = vmatprep.subr.mxu0 0.0
        %515 = vmatpush1.msra.mxu0 0.0
        %516 = vmatprep.subr.mxu0 0.0
        %517 = vmatpush1.msra.mxu0 0.0
        %518 = vmatprep.subr.mxu0 0.0
        %519 = vmatpush1.msra.mxu0 0.0
        %520 = vmatprep.subr.mxu0 0.0
        %521 = vmatpush1.msra.mxu0 0.0
        %522 = vmatprep.subr.mxu0 0.0
        %523 = vmatpush1.msra.mxu0 0.0
        %524 = vmatprep.subr.mxu0 0.0
        %525 = vmatpush1.msra.mxu0 0.0
        %526 = vmatprep.subr.mxu0 0.0
        %527 = vmatpush1.msra.mxu0 0.0
        %528 = vmatprep.mubr.f32.mxu0 0.0
        %529 = vmatmul.mubr.f32.gmra.mrb[0].mxu0 %v432
        %v530 = vpop.f32.mrb[0].mxu0
        %v531 = vadd.f32 0.0, %v530
        %v532 = vpop.f32.mrb[0].mxu0
        %533 = vmatprep.mubr.f32.mxu0 0.0
        %534 = vmatmul.mubr.f32.gmra.mrb[0].mxu0 %v434
        %v535 = vpop.f32.mrb[0].mxu0
        %v536 = vadd.f32 0.0, %v535
        %v537 = vpop.f32.mrb[0].mxu0
        %538 = vdwg.mxu0
        %v539 = vadd.f32 %v462, %v531
        %v540 = vadd.f32 %v463, %v536
        %541 = vst [vmem:[#allocation4] sm:$0xff] %v539
        %542 = vst [vmem:[#allocation4 + $0x8] sm:$0x3] %v540
        %543 = vst.msk [vmem:[#allocation2] sm:$0xff] %vm446, %v407
        %544 = vst.msk [vmem:[#allocation2 + $0x8] sm:$0x3] %vm448, %v408
        %p545 = scmp.eq.s32.totalorder %s20, 1
        // Predicated region
        $region41: #{tpu_custom_call.1} parent=27 // pred_check
          %p546 = pneg %p545
        $region42: #{tpu_custom_call.1} parent=27 // pred_check_branch
          %548 = sbr.rel (%p546) target = $region44
        $region43: #{tpu_custom_call.1} parent=27 // pred_region
          %v549 = vld [vmem:[#allocation4] sm:$0xff]
          %v550 = vld [vmem:[#allocation4 + $0x8] sm:$0x3]
          %v551 = vld [vmem:[#allocation3] sm:$0xff]
          %v552 = vld [vmem:[#allocation3 + $0x8] sm:$0x3]
          %554 = vset.pattern.permute.xlu0 0
          %555 = vperm.xlu0 %554, %v551
          %v556 = vpop.permute.xlu0 %555
          %559 = vset.pattern.permute.xlu0 0
          %560 = vperm.xlu0 %559, %v552
          %v561 = vpop.permute.xlu0 %560
          %v563 = vrcp.pop %v556
          %v564 = vmul.f32 %v549, %v563
          %v565 = vrcp.pop %v561
          %v566 = vmul.f32 %v550, %v565
          %v567 = vsel %vm403, %v566, 0.0
          %v568 = vadd.f32 %v564, %v567
          %v569 = vrot.slane %v568, 4
          %v570 = vadd.f32 %v568, %v569
          %v571 = vrot.slane %v570, 2
          %v572 = vadd.f32 %v570, %v571
          %v573 = vrot.slane %v572, 1
          %v574 = vadd.f32 %v572, %v573
          %v575 = vrcp.pop 10.0
          %v576 = vmul.f32 %v574, %v575
          %577 = vst [vmem:[#allocation13] sm:$0x1] %v576
        $region44: #{tpu_custom_call.1} parent=27 // pred_fallthru
          _
        // Predicated region
        $region45: #{tpu_custom_call.1} parent=27 // pred_check
          %p578 = pneg %p80
        $region46: #{tpu_custom_call.1} parent=27 // pred_check_branch
          %580 = sbr.rel (%p578) target = $region48
        $region47: #{tpu_custom_call.1} parent=27 // pred_region
          %s582 = ssub.s32 16, 16
          %583 = vsyncadd [#allocation10], %s582
          %s585 = sshll.u32 [#allocation13], 4
          %s586 = int_to_ptr.vmem [resolvable:$true] %s585
          %588 = dma.vmem_to_hbm [thread:$0]  %s586, 16, %s3, [#allocation10]
        $region48: #{tpu_custom_call.1} parent=27 // pred_fallthru
          _
        // Predicated region
        $region49: #{tpu_custom_call.1} parent=27 // pred_check
          %p589 = pneg %p80
        $region50: #{tpu_custom_call.1} parent=27 // pred_check_branch
          %591 = sbr.rel (%p589) target = $region52
        $region51: #{tpu_custom_call.1} parent=27 // pred_region
          %592 = dma.done [#allocation10], 16
        $region52: #{tpu_custom_call.1} parent=27 // pred_fallthru
          _
      $region28: #{tpu_custom_call.1} parent=5 // pred_fallthru
        _
      %p593 = scmp.le.s32.totalorder 2, %s15
      // Predicated region
      $region53: #{tpu_custom_call.1} parent=5 // pred_check
        %p594 = pneg %p593
      $region54: #{tpu_custom_call.1} parent=5 // pred_check_branch
        %596 = sbr.rel (%p594) target = $region56
      $region55: #{tpu_custom_call.1} parent=5 // pred_region
        %s597 = ssub.s32 %s15, 2
      $region56: #{tpu_custom_call.1} parent=5 // pred_fallthru
        _
    $region6: #{tpu_custom_call.1} parent=1 // loop_footer
      %s19 = sadd.s32 1, %s15
    $region7: #{tpu_custom_call.1} parent=1 // loop_footer_branch
      %14 = sbr.rel target = $region3
    $region8: #{tpu_custom_call.1} parent=1 // loop_exit
      _
    %598 = vsyncpa [#allocation9], 1
    %s599 = scalar_lea.sflag [#allocation9], 1
    %600 = vsyncpa %s599, 1
    %601 = vsyncpa [#allocation12], 1
    %s602 = scalar_lea.sflag [#allocation12], 1
    %603 = vsyncpa %s602, 1
    %604 = vsyncpa [#allocation10], 1
    %s605 = scalar_lea.sflag [#allocation10], 1
    %606 = vsyncpa %s605, 1

</llo_original>
